<compile_context>
chip_gen: v7x
topology: tpu7x:2x2x1
jax: 0.10.0
libtpu: 0.0.40
codegen_flags: <defaults>
</compile_context>

<pallas_src>
import functools

import jax
import jax.numpy as jnp
from jax import lax
from jax.experimental import pallas as pl
from jax.experimental.pallas import tpu as pltpu

# Stand-in for `data_set.count` (SC_DataGenerator is not available here).
MAX_ACTION_NUM = 8

H1 = 64          # fc1 output width
H2 = 30          # hidden width of both streams
A = MAX_ACTION_NUM

# ---- static packed-parameter blob layout: rows of a (P_ROWS, 128) f32 buffer ----
# All kernel reads are lane-0-aligned slices of width 64 or 128.
ROW_W1 = 0        # fc1 weight, lanes [0:64)
ROW_B1 = 1        # fc1 bias,   lanes [0:64)
ROW_B1C = 2       # fused stream-1 bias [bv1 | ba1 | 0], lanes [0:64)
ROW_SB1 = 3       # stream-1 sigma bias [0 | sig_b1 | 0], lanes [0:64)
ROW_B2 = 4        # stream-2 bias: lanes [0:A)=ba2, lane A=bv2
ROW_SB2 = 5       # stream-2 sigma bias: lanes [0:A)=sig_b2
ROW_W1CAT = 8     # 64 rows, lanes [0:64):  [Wv1 | Wa1 | 0]
ROW_S1 = 72       # 64 rows, lanes [0:64):  [0 | sig_w1 | 0]
ROW_W2 = 136      # 64 rows: rows [0:30) lane A = Wv2, rows [30:60) lanes [0:A) = Wa2
ROW_S2 = 200      # 64 rows: rows [30:60) lanes [0:A) = sig_w2
P_ROWS = 264      # multiple of 8

# ---- per-call noise slab (8, 128) of raw N(0,1) samples ----
# row 0, lanes [0:64)  : eps_in  of NoisyLinear1(64, 30)
# row 1, lanes [30:60) : eps_out of NoisyLinear1(64, 30)
# row 2, lanes [30:60) : eps_in  of NoisyLinear1(30, A)
# row 3, lanes [0:A)   : eps_out of NoisyLinear1(30, A)
# All other lanes are ignored: they only ever multiply structural zeros.


def dueling_kernel(x_ref, p_ref, n_ref, out_ref, *, nvalid):
    x = x_ref[...]                                              # (B, 1)

    # f(eps) = sign(eps) * sqrt(|eps|) on the whole (8,128) slab (one vreg).
    eps = n_ref[...]
    fe = jnp.where(eps >= 0.0, 1.0, -1.0) * jnp.sqrt(jnp.abs(eps))
    fin1 = fe[0:1, 0:H1]          # (1, 64)
    fout1 = fe[1:2, 0:H1]         # (1, 64)  only lanes [30:60) are live
    fin2 = fe[2:3, 0:H1]          # (1, 64)  only lanes [30:60) are live
    fout2 = fe[3:4, :]            # (1, 128) only lanes [0:A) are live

    w1 = p_ref[ROW_W1:ROW_W1 + 1, 0:H1]                         # (1, 64)
    b1 = p_ref[ROW_B1:ROW_B1 + 1, 0:H1]                         # (1, 64)
    b1c = p_ref[ROW_B1C:ROW_B1C + 1, 0:H1]                      # (1, 64)
    sb1 = p_ref[ROW_SB1:ROW_SB1 + 1, 0:H1]                      # (1, 64)
    b2 = p_ref[ROW_B2:ROW_B2 + 1, :]                            # (1, 128)
    sb2 = p_ref[ROW_SB2:ROW_SB2 + 1, :]                         # (1, 128)
    W1b = p_ref[ROW_W1CAT:ROW_W1CAT + H1, 0:H1]                 # (64, 64)  [Wv1 | Wa1]
    S1 = p_ref[ROW_S1:ROW_S1 + H1, 0:H1]                        # (64, 64)  [0 | sig_w1]
    W2b = p_ref[ROW_W2:ROW_W2 + H1, :]                          # (64, 128)
    S2 = p_ref[ROW_S2:ROW_S2 + H1, :]                           # (64, 128)

    # fc1: in_features == 1 -> broadcast multiply on the VPU (no MXU pass).
    h = jnp.maximum(x * w1 + b1, 0.0)                           # (B, 64)

    # Fused stream-1 ([hv | ha]).  Factorised noise via row/col rescaling:
    #     h @ (W + S * outer(fi, fo)) == h @ W + ((h * fi) @ S) * fo
    base1 = jnp.dot(h, W1b, preferred_element_type=jnp.float32)
    noi1 = jnp.dot(h * fin1, S1, preferred_element_type=jnp.float32) * fout1
    hva = jnp.maximum(base1 + noi1 + b1c + sb1 * fout1, 0.0)    # (B, 64)

    # Fused stream-2: advantages in lanes [0:A), value in lane A, zeros elsewhere.
    base2 = jnp.dot(hva, W2b, preferred_element_type=jnp.float32)
    noi2 = jnp.dot(hva * fin2, S2, preferred_element_type=jnp.float32) * fout2
    va = base2 + noi2 + b2 + sb2 * fout2                        # (B, 128)

    # Dueling combine with a GLOBAL advantage mean over the first nvalid rows.
    # Lanes [A+1:128) of va are exact zeros by construction, so
    #     sum(advantages) == sum(va) - sum(value column).
    values = va[:, A:A + 1]                                     # (B, 1)
    adv_sum = jnp.sum(va[:nvalid]) - jnp.sum(values[:nvalid])
    adv_mean = adv_sum * (1.0 / (nvalid * A))

    # Lane-dense full-width store; lanes [0:A) hold q, the rest is garbage.
    out_ref[...] = va + (values - adv_mean)


def sample_noise(key):
    """One raw (8,128) N(0,1) slab per forward call (fresh noise per call)."""
    return jax.random.normal(key, (8, 128), jnp.float32)


def pack_static(params):
    """Pack all static weights/biases/sigmas into ONE (P_ROWS, 128) f32 blob.

    Called once per parameter set; the result is reused for every forward.
    """
    f32 = jnp.float32
    z = lambda r, c: jnp.zeros((r, c), f32)

    def pad_to(a, rows, cols):
        a = a.astype(f32)
        return jnp.pad(a, ((0, rows - a.shape[0]), (0, cols - a.shape[1])))

    # Stream-2 base weight (value column at lane A) and its sigma block.
    w2_top = jnp.concatenate([z(H2, A), params["wv2"], z(H2, 128 - A - 1)], axis=1)
    w2_bot = pad_to(params["wa2"], H2, 128)
    w2 = jnp.concatenate([w2_top, w2_bot, z(H1 - 2 * H2, 128)], axis=0)       # (64, 128)
    s2 = jnp.concatenate([z(H2, 128), pad_to(params["sig_w2"], H2, 128),
                          z(H1 - 2 * H2, 128)], axis=0)                       # (64, 128)

    blob = jnp.concatenate([
        pad_to(params["w1"], 1, 128),                                         # row 0
        pad_to(params["b1"], 1, 128),                                         # row 1
        pad_to(jnp.concatenate([params["bv1"], params["ba1"]], axis=1), 1, 128),  # row 2
        jnp.concatenate([z(1, H2), params["sig_b1"], z(1, 128 - 2 * H2)], axis=1),  # row 3
        jnp.concatenate([params["ba2"], params["bv2"], z(1, 128 - A - 1)], axis=1),  # row 4
        pad_to(params["sig_b2"], 1, 128),                                     # row 5
        z(2, 128),                                                            # rows 6..7
        pad_to(jnp.concatenate([params["wv1"], params["wa1"]], axis=1), H1, 128),   # 8..71
        jnp.concatenate([z(H1, H2), params["sig_w1"], z(H1, 128 - 2 * H2)], axis=1),  # 72..135
        w2,                                                                   # rows 136..199
        s2,                                                                   # rows 200..263
    ], axis=0)
    assert blob.shape == (P_ROWS, 128)
    return blob


@jax.jit
def noisy_dueling_forward(blob, x, key):
    """Per-call work: one (8,128) normal draw + one single-block Pallas kernel."""
    B = x.shape[0]
    Bp = ((B + 7) // 8) * 8                       # full f32 sublane groups
    xp = jnp.pad(x, ((0, Bp - B), (0, 0))) if Bp != B else x
    noise = sample_noise(key)
    vmem = pl.BlockSpec(memory_space=pltpu.MemorySpace.VMEM)
    out = pl.pallas_call(
        functools.partial(dueling_kernel, nvalid=B),
        out_shape=jax.ShapeDtypeStruct((Bp, 128), jnp.float32),
        in_specs=[vmem, vmem, vmem],
        out_specs=vmem,
    )(xp, blob, noise)
    return out[:B, 0:A]                            # lane-0 aligned slice


def init_params(key):
    ks = jax.random.split(key, 10)

    def lin(kw, kb, fan_in, fan_out):
        bound = 1.0 / jnp.sqrt(jnp.float32(fan_in))
        w = jax.random.uniform(kw, (fan_in, fan_out), jnp.float32, -bound, bound)
        b = jax.random.uniform(kb, (1, fan_out), jnp.float32, -bound, bound)
        return w, b

    w1, b1 = lin(ks[0], ks[1], 1, H1)
    wv1, bv1 = lin(ks[2], ks[3], H1, H2)
    wv2, bv2 = lin(ks[4], ks[5], H2, 1)
    wa1, ba1 = lin(ks[6], ks[7], H1, H2)   # NoisyLinear1 inherits nn.Linear init
    wa2, ba2 = lin(ks[8], ks[9], H2, A)
    sigma_zero = 0.5
    return dict(
        w1=w1, b1=b1,
        wv1=wv1, bv1=bv1, wv2=wv2, bv2=bv2,
        wa1=wa1, ba1=ba1,
        sig_w1=jnp.full((H1, H2), -1.0 / jnp.sqrt(jnp.float32(H1)), jnp.float32),
        sig_b1=jnp.full((1, H2), (sigma_zero / jnp.sqrt(jnp.float32(H1)))
                        / jnp.sqrt(jnp.float32(H1)), jnp.float32),
        wa2=wa2, ba2=ba2,
        sig_w2=jnp.full((H2, A), -1.0 / jnp.sqrt(jnp.float32(H2)), jnp.float32),
        sig_b2=jnp.full((1, A), (sigma_zero / jnp.sqrt(jnp.float32(H2)))
                        / jnp.sqrt(jnp.float32(H2)), jnp.float32),
    )


def reference_forward(params, x, key):
    """Pure-JAX reference (HIGHEST-precision dots) using the same noise slab."""
    HI = lax.Precision.HIGHEST
    noise = sample_noise(key)
    f = lambda e: jnp.sign(e) * jnp.sqrt(jnp.abs(e))
    fin1 = f(noise[0, 0:H1])            # (64,)
    fout1 = f(noise[1, H2:2 * H2])      # (30,)
    fin2 = f(noise[2, H2:2 * H2])       # (30,)
    fout2 = f(noise[3, 0:A])            # (A,)
    wa1_n = params["wa1"] + params["sig_w1"] * (fin1[:, None] * fout1[None, :])
    ba1_n = params["ba1"] + params["sig_b1"] * fout1[None, :]
    wa2_n = params["wa2"] + params["sig_w2"] * (fin2[:, None] * fout2[None, :])
    ba2_n = params["ba2"] + params["sig_b2"] * fout2[None, :]
    h = jnp.maximum(jnp.dot(x, params["w1"], precision=HI) + params["b1"], 0.0)
    hv = jnp.maximum(jnp.dot(h, params["wv1"], precision=HI) + params["bv1"], 0.0)
    values = jnp.dot(hv, params["wv2"], precision=HI) + params["bv2"]
    ha = jnp.maximum(jnp.dot(h, wa1_n, precision=HI) + ba1_n, 0.0)
    adv = jnp.dot(ha, wa2_n, precision=HI) + ba2_n
    return values + (adv - jnp.mean(adv))


if __name__ == "__main__":
    key = jax.random.PRNGKey(0)
    k_param, k_x, k_noise = jax.random.split(key, 3)

    B = 8
    x = jax.random.normal(k_x, (B, 1), jnp.float32)
    params = init_params(k_param)
    blob = pack_static(params)          # packed ONCE, reused for every forward

    q = noisy_dueling_forward(blob, x, k_noise)
    q = jax.block_until_ready(q)

    q_ref = reference_forward(params, x, k_noise)
    assert q.shape == (B, MAX_ACTION_NUM)
    err = float(jnp.max(jnp.abs(q - q_ref)))
    assert jnp.allclose(q, q_ref, atol=1e-3, rtol=1e-3), err

    print("KERNEL_OK")
</pallas_src>

<mosaic_0001>
module attributes {stable_mosaic.version = 11 : i64} {
  func.func @dueling_kernel(%arg0: memref<8x1xf32, #tpu.memory_space<vmem>>, %arg1: memref<264x128xf32, #tpu.memory_space<vmem>>, %arg2: memref<8x128xf32, #tpu.memory_space<vmem>>, %arg3: memref<8x128xf32, #tpu.memory_space<vmem>>) attributes {dimension_semantics = [], scalar_prefetch = 0 : i64, scratch_operands = 0 : i64, tpu.core_type = #tpu.core_type<tc>} {
    %c0 = arith.constant 0 : index
    %c0_0 = arith.constant 0 : index
    %0 = vector.load %arg0[%c0, %c0_0] : memref<8x1xf32, #tpu.memory_space<vmem>>, vector<8x1xf32>
    %c0_1 = arith.constant 0 : index
    %c0_2 = arith.constant 0 : index
    %1 = vector.load %arg2[%c0_1, %c0_2] : memref<8x128xf32, #tpu.memory_space<vmem>>, vector<8x128xf32>
    %cst = arith.constant 0.000000e+00 : f32
    %2 = vector.broadcast %cst : f32 to vector<8x128xf32>
    %3 = arith.cmpf oge, %1, %2 : vector<8x128xf32>
    %cst_3 = arith.constant 1.000000e+00 : f32
    %cst_4 = arith.constant -1.000000e+00 : f32
    %4 = vector.broadcast %cst_3 : f32 to vector<8x128xf32>
    %5 = vector.broadcast %cst_4 : f32 to vector<8x128xf32>
    %6 = arith.select %3, %4, %5 : vector<8x128xi1>, vector<8x128xf32>
    %7 = math.absf %1 : vector<8x128xf32>
    %8 = math.sqrt %7 : vector<8x128xf32>
    %9 = arith.mulf %6, %8 : vector<8x128xf32>
    %10 = vector.extract_strided_slice %9 {offsets = [0, 0], sizes = [1, 64], strides = [1, 1]} : vector<8x128xf32> to vector<1x64xf32>
    %11 = vector.extract_strided_slice %9 {offsets = [1, 0], sizes = [1, 64], strides = [1, 1]} : vector<8x128xf32> to vector<1x64xf32>
    %12 = vector.extract_strided_slice %9 {offsets = [2, 0], sizes = [1, 64], strides = [1, 1]} : vector<8x128xf32> to vector<1x64xf32>
    %13 = vector.extract_strided_slice %9 {offsets = [3, 0], sizes = [1, 128], strides = [1, 1]} : vector<8x128xf32> to vector<1x128xf32>
    %c0_5 = arith.constant 0 : index
    %c0_6 = arith.constant 0 : index
    %14 = vector.load %arg1[%c0_5, %c0_6] : memref<264x128xf32, #tpu.memory_space<vmem>>, vector<1x64xf32>
    %c1 = arith.constant 1 : index
    %c0_7 = arith.constant 0 : index
    %15 = vector.load %arg1[%c1, %c0_7] : memref<264x128xf32, #tpu.memory_space<vmem>>, vector<1x64xf32>
    %c2 = arith.constant 2 : index
    %c0_8 = arith.constant 0 : index
    %16 = vector.load %arg1[%c2, %c0_8] : memref<264x128xf32, #tpu.memory_space<vmem>>, vector<1x64xf32>
    %c3 = arith.constant 3 : index
    %c0_9 = arith.constant 0 : index
    %17 = vector.load %arg1[%c3, %c0_9] : memref<264x128xf32, #tpu.memory_space<vmem>>, vector<1x64xf32>
    %c4 = arith.constant 4 : index
    %c0_10 = arith.constant 0 : index
    %18 = vector.load %arg1[%c4, %c0_10] : memref<264x128xf32, #tpu.memory_space<vmem>>, vector<1x128xf32>
    %c5 = arith.constant 5 : index
    %c0_11 = arith.constant 0 : index
    %19 = vector.load %arg1[%c5, %c0_11] : memref<264x128xf32, #tpu.memory_space<vmem>>, vector<1x128xf32>
    %c8 = arith.constant 8 : index
    %c0_12 = arith.constant 0 : index
    %20 = vector.load %arg1[%c8, %c0_12] : memref<264x128xf32, #tpu.memory_space<vmem>>, vector<64x64xf32>
    %c72 = arith.constant 72 : index
    %c0_13 = arith.constant 0 : index
    %21 = vector.load %arg1[%c72, %c0_13] : memref<264x128xf32, #tpu.memory_space<vmem>>, vector<64x64xf32>
    %c136 = arith.constant 136 : index
    %c0_14 = arith.constant 0 : index
    %22 = vector.load %arg1[%c136, %c0_14] : memref<264x128xf32, #tpu.memory_space<vmem>>, vector<64x128xf32>
    %c200 = arith.constant 200 : index
    %c0_15 = arith.constant 0 : index
    %23 = vector.load %arg1[%c200, %c0_15] : memref<264x128xf32, #tpu.memory_space<vmem>>, vector<64x128xf32>
    %24 = vector.broadcast %0 : vector<8x1xf32> to vector<8x64xf32>
    %25 = vector.broadcast %14 : vector<1x64xf32> to vector<8x64xf32>
    %26 = arith.mulf %24, %25 : vector<8x64xf32>
    %27 = vector.broadcast %15 : vector<1x64xf32> to vector<8x64xf32>
    %28 = arith.addf %26, %27 : vector<8x64xf32>
    %cst_16 = arith.constant 0.000000e+00 : f32
    %29 = vector.broadcast %cst_16 : f32 to vector<8x64xf32>
    %30 = arith.maximumf %28, %29 : vector<8x64xf32>
    %cst_17 = arith.constant dense<0.000000e+00> : vector<8x64xf32>
    %31 = tpu.matmul %30, %20, %cst_17 {dimension_numbers = #tpu.dot_dimension_numbers<[1], [0], [0], [1], [0, 0, 1, 1], [], []>} : vector<8x64xf32>, vector<64x64xf32>, vector<8x64xf32> -> vector<8x64xf32>
    %32 = vector.broadcast %10 : vector<1x64xf32> to vector<8x64xf32>
    %33 = arith.mulf %30, %32 : vector<8x64xf32>
    %cst_18 = arith.constant dense<0.000000e+00> : vector<8x64xf32>
    %34 = tpu.matmul %33, %21, %cst_18 {dimension_numbers = #tpu.dot_dimension_numbers<[1], [0], [0], [1], [0, 0, 1, 1], [], []>} : vector<8x64xf32>, vector<64x64xf32>, vector<8x64xf32> -> vector<8x64xf32>
    %35 = vector.broadcast %11 : vector<1x64xf32> to vector<8x64xf32>
    %36 = arith.mulf %34, %35 : vector<8x64xf32>
    %37 = arith.addf %31, %36 : vector<8x64xf32>
    %38 = vector.broadcast %16 : vector<1x64xf32> to vector<8x64xf32>
    %39 = arith.addf %37, %38 : vector<8x64xf32>
    %40 = arith.mulf %17, %11 : vector<1x64xf32>
    %41 = vector.broadcast %40 : vector<1x64xf32> to vector<8x64xf32>
    %42 = arith.addf %39, %41 : vector<8x64xf32>
    %cst_19 = arith.constant 0.000000e+00 : f32
    %43 = vector.broadcast %cst_19 : f32 to vector<8x64xf32>
    %44 = arith.maximumf %42, %43 : vector<8x64xf32>
    %cst_20 = arith.constant dense<0.000000e+00> : vector<8x128xf32>
    %45 = tpu.matmul %44, %22, %cst_20 {dimension_numbers = #tpu.dot_dimension_numbers<[1], [0], [0], [1], [0, 0, 1, 1], [], []>} : vector<8x64xf32>, vector<64x128xf32>, vector<8x128xf32> -> vector<8x128xf32>
    %46 = vector.broadcast %12 : vector<1x64xf32> to vector<8x64xf32>
    %47 = arith.mulf %44, %46 : vector<8x64xf32>
    %cst_21 = arith.constant dense<0.000000e+00> : vector<8x128xf32>
    %48 = tpu.matmul %47, %23, %cst_21 {dimension_numbers = #tpu.dot_dimension_numbers<[1], [0], [0], [1], [0, 0, 1, 1], [], []>} : vector<8x64xf32>, vector<64x128xf32>, vector<8x128xf32> -> vector<8x128xf32>
    %49 = vector.broadcast %13 : vector<1x128xf32> to vector<8x128xf32>
    %50 = arith.mulf %48, %49 : vector<8x128xf32>
    %51 = arith.addf %45, %50 : vector<8x128xf32>
    %52 = vector.broadcast %18 : vector<1x128xf32> to vector<8x128xf32>
    %53 = arith.addf %51, %52 : vector<8x128xf32>
    %54 = arith.mulf %19, %13 : vector<1x128xf32>
    %55 = vector.broadcast %54 : vector<1x128xf32> to vector<8x128xf32>
    %56 = arith.addf %53, %55 : vector<8x128xf32>
    %57 = vector.extract_strided_slice %56 {offsets = [0, 8], sizes = [8, 1], strides = [1, 1]} : vector<8x128xf32> to vector<8x1xf32>
    %58 = vector.shape_cast %56 : vector<8x128xf32> to vector<1x8x128xf32>
    %cst_22 = arith.constant dense<0.000000e+00> : vector<1xf32>
    %59 = vector.multi_reduction <add>, %58, %cst_22 [1, 2] : vector<1x8x128xf32> to vector<1xf32>
    %60 = vector.shape_cast %59 : vector<1xf32> to vector<1x1x1xf32>
    %61 = vector.extract %60[0, 0, 0] : f32 from vector<1x1x1xf32>
    %62 = vector.shape_cast %57 : vector<8x1xf32> to vector<1x8x1xf32>
    %cst_23 = arith.constant dense<0.000000e+00> : vector<1xf32>
    %63 = vector.multi_reduction <add>, %62, %cst_23 [1, 2] : vector<1x8x1xf32> to vector<1xf32>
    %64 = vector.shape_cast %63 : vector<1xf32> to vector<1x1x1xf32>
    %65 = vector.extract %64[0, 0, 0] : f32 from vector<1x1x1xf32>
    %66 = arith.subf %61, %65 : f32
    %cst_24 = arith.constant 1.562500e-02 : f32
    %67 = arith.mulf %66, %cst_24 : f32
    %68 = vector.broadcast %67 : f32 to vector<8x1xf32>
    %69 = arith.subf %57, %68 : vector<8x1xf32>
    %70 = vector.broadcast %69 : vector<8x1xf32> to vector<8x128xf32>
    %71 = arith.addf %56, %70 : vector<8x128xf32>
    %c0_25 = arith.constant 0 : index
    %c0_26 = arith.constant 0 : index
    %72 = vector.load %arg3[%c0_25, %c0_26] : memref<8x128xf32, #tpu.memory_space<vmem>>, vector<8x128xf32>
    tpu.vector_store %arg3[%c0_25, %c0_26], %71 {strides = array<i32>} : memref<8x128xf32, #tpu.memory_space<vmem>>, vector<8x128xf32>,
    return
  }
}

</mosaic_0001>

<llo_original>
// kernel: noisy_dueling_forward.1
$region0: #{noisy_dueling_forward.1}
  #allocation0 [shape = 'u32[]', space=smem, size = 0x4, offset = 0x4, fixed_abs, tag = 'smem constant byte address 0x4 - core index']
  #allocation1 [shape = 'u32[144,128]{1,0:T(1,128)}', space=vmem, size = 0x12000, scoped, tag = 'internal scratch']
  %s0 = inlined_call_operand.vmem [shape: f32[8,1], index: 0, kind: input, shape index: {}]
  %s1 = inlined_call_operand.hbm [shape: f32[264,128], index: 1, kind: input, shape index: {}]
  %s2 = inlined_call_operand.vmem [shape: f32[8,128], index: 2, kind: input, shape index: {}]
  %s3 = inlined_call_operand.hbm [shape: f32[8,128], index: 3, kind: output, shape index: {}]
  %s4 = sld [smem:[#allocation0]]
  $region26: #{noisy_dueling_forward.1} parent=0
    _
  %s6 = ssub.s32 1, %s4
  %s7 = scalar_select 0, %s6, %s4
  $region1: #{noisy_dueling_forward.1} parent=0
    #allocation2 [shape = 'u8[135168]{0}', space=vmem, size = 0x21000, scoped, tag = 'input window, operand 1, single buffered']
    #allocation3 [shape = 's32[1]{0}', space=sflag, size = 0x4, scoped, tag = 'scoped memory for noisy_dueling_forward.1']
    #allocation4 [shape = 's32[1]{0}', space=sflag, size = 0x4, scoped, tag = 'scoped memory for noisy_dueling_forward.1']
    #allocation5 [shape = 'u8[4096]{0}', space=vmem, size = 0x1000, scoped, tag = 'output window, operand 0, single buffered']
    %8 = vsyncpa [#allocation3], 0
    %9 = vsyncpa [#allocation4], 0
    // Predicated region
    $region2: #{noisy_dueling_forward.1} parent=1 // pred_check
      _
    $region3: #{noisy_dueling_forward.1} parent=1 // pred_check_branch
      %11 = sbr.rel (0) target = $region5
    $region4: #{noisy_dueling_forward.1} parent=1 // pred_region
      _
    $region5: #{noisy_dueling_forward.1} parent=1 // pred_fallthru
      _
    // Predicated region
    $region6: #{noisy_dueling_forward.1} parent=1 // pred_check
      _
    $region7: #{noisy_dueling_forward.1} parent=1 // pred_check_branch
      %13 = sbr.rel (0) target = $region9
    $region8: #{noisy_dueling_forward.1} parent=1 // pred_region
      %s15 = ssub.s32 4224, 4224
      %16 = vsyncadd [#allocation3], %s15
      %s17 = sshll.u32 [#allocation2], 4
      %s18 = int_to_ptr.vmem [resolvable:$true] %s17
      %23 = dma.hbm_to_vmem [thread:$0]  %s1, 4224, %s18, [#allocation3], 128, 128, 8
    $region9: #{noisy_dueling_forward.1} parent=1 // pred_fallthru
      _
    // Predicated region
    $region10: #{noisy_dueling_forward.1} parent=1 // pred_check
      _
    $region11: #{noisy_dueling_forward.1} parent=1 // pred_check_branch
      %25 = sbr.rel (0) target = $region13
    $region12: #{noisy_dueling_forward.1} parent=1 // pred_region
      _
    $region13: #{noisy_dueling_forward.1} parent=1 // pred_fallthru
      _
    // Predicated region
    $region14: #{noisy_dueling_forward.1} parent=1 // pred_check
      _
    $region15: #{noisy_dueling_forward.1} parent=1 // pred_check_branch
      %27 = sbr.rel (0) target = $region17
    $region16: #{noisy_dueling_forward.1} parent=1 // pred_region
      %28 = dma.done [#allocation3], 4224
    $region17: #{noisy_dueling_forward.1} parent=1 // pred_fallthru
      _
    %v29 = vld [vmem:[%s0] sm:$0xff]
    %v30 = vld [vmem:[%s2] sm:$0xff]
    %vm31 = vcmp.ge.f32.partialorder %v30, 0.0
    %v32 = vsel %vm31, 1.0, -1.0
    %v33 = vand.u32 2147483647, %v30
    %v34 = vrsqrt.pop %v33
    %v35 = vmul.f32 %v33, %v34
    %vm36 = vcmp.eq.f32.partialorder %v33, inf
    %v37 = vsel %vm36, %v33, %v35
    %vm38 = vcmp.eq.f32.partialorder %v33, 0.0
    %v39 = vand.u32 %v33, 2147483648
    %v40 = vsel %vm38, %v39, %v37
    %v41 = vmul.f32 %v32, %v40
    %v42 = vld [vmem:[#allocation2] sm:$0x1]
    %v43 = vld [vmem:[#allocation2 + $0x1] sm:$0x1]
    %v44 = vld [vmem:[#allocation2 + $0x2] sm:$0x1]
    %v45 = vld [vmem:[#allocation2 + $0x3] sm:$0x1]
    %v46 = vld [vmem:[#allocation2 + $0x4] sm:$0x1]
    %v47 = vld [vmem:[#allocation2 + $0x5] sm:$0x1]
    %v48 = vld [vmem:[#allocation2 + $0x8] sm:$0xff]
    %v49 = vld [vmem:[#allocation2 + $0x10] sm:$0xff]
    %v50 = vld [vmem:[#allocation2 + $0x18] sm:$0xff]
    %v51 = vld [vmem:[#allocation2 + $0x20] sm:$0xff]
    %v52 = vld [vmem:[#allocation2 + $0x28] sm:$0xff]
    %v53 = vld [vmem:[#allocation2 + $0x30] sm:$0xff]
    %v54 = vld [vmem:[#allocation2 + $0x38] sm:$0xff]
    %v55 = vld [vmem:[#allocation2 + $0x40] sm:$0xff]
    %v56 = vld [vmem:[#allocation2 + $0x48] sm:$0xff]
    %v57 = vld [vmem:[#allocation2 + $0x50] sm:$0xff]
    %v58 = vld [vmem:[#allocation2 + $0x58] sm:$0xff]
    %v59 = vld [vmem:[#allocation2 + $0x60] sm:$0xff]
    %v60 = vld [vmem:[#allocation2 + $0x68] sm:$0xff]
    %v61 = vld [vmem:[#allocation2 + $0x70] sm:$0xff]
    %v62 = vld [vmem:[#allocation2 + $0x78] sm:$0xff]
    %v63 = vld [vmem:[#allocation2 + $0x80] sm:$0xff]
    %v64 = vld [vmem:[#allocation2 + $0x88] sm:$0xff]
    %v65 = vld [vmem:[#allocation2 + $0x90] sm:$0xff]
    %v66 = vld [vmem:[#allocation2 + $0x98] sm:$0xff]
    %v67 = vld [vmem:[#allocation2 + $0xa0] sm:$0xff]
    %v68 = vld [vmem:[#allocation2 + $0xa8] sm:$0xff]
    %v69 = vld [vmem:[#allocation2 + $0xb0] sm:$0xff]
    %v70 = vld [vmem:[#allocation2 + $0xb8] sm:$0xff]
    %v71 = vld [vmem:[#allocation2 + $0xc0] sm:$0xff]
    %v72 = vld [vmem:[#allocation2 + $0xc8] sm:$0xff]
    %v73 = vld [vmem:[#allocation2 + $0xd0] sm:$0xff]
    %v74 = vld [vmem:[#allocation2 + $0xd8] sm:$0xff]
    %v75 = vld [vmem:[#allocation2 + $0xe0] sm:$0xff]
    %v76 = vld [vmem:[#allocation2 + $0xe8] sm:$0xff]
    %v77 = vld [vmem:[#allocation2 + $0xf0] sm:$0xff]
    %v78 = vld [vmem:[#allocation2 + $0xf8] sm:$0xff]
    %v79 = vld [vmem:[#allocation2 + $0x100] sm:$0xff]
    %81 = vset.pattern.permute.xlu0 0
    %82 = vperm.xlu0 %81, %v29
    %v83 = vpop.permute.xlu0 %82
    %v85 = vlaneseq
    %v86 = vshrl.u32 %v85, 7
    %v87 = vsub.s32 0, %v86
    %v88 = vrot.slane %v42, %v87
    %v89 = vmul.f32 %v83, %v88
    %v90 = vlaneseq
    %v91 = vshrl.u32 %v90, 7
    %v92 = vsub.s32 0, %v91
    %v93 = vrot.slane %v43, %v92
    %v94 = vadd.f32 %v89, %v93
    %v95 = vmax.f32 %v94, 0.0
    %v96 = vlaneseq
    %v97 = vshrl.u32 %v96, 7
    %v98 = vsub.s32 0, %v97
    %v99 = vrot.slane %v41, %v98
    %v100 = vmul.f32 %v95, %v99
    %vm101 = vcmask 523264
    %v103 = vsel %vm101, %v100, 0
    %105 = vmatprep.subr.mxu0 0.0
    %106 = vmatpush1.msra.mxu0 %v56
    %107 = vmatprep.subr.mxu0 0.0
    %108 = vmatpush1.msra.mxu0 %v57
    %109 = vmatprep.subr.mxu0 0.0
    %110 = vmatpush1.msra.mxu0 %v58
    %111 = vmatprep.subr.mxu0 0.0
    %112 = vmatpush1.msra.mxu0 %v59
    %113 = vmatprep.subr.mxu0 0.0
    %114 = vmatpush1.msra.mxu0 %v60
    %115 = vmatprep.subr.mxu0 0.0
    %116 = vmatpush1.msra.mxu0 %v61
    %117 = vmatprep.subr.mxu0 0.0
    %118 = vmatpush1.msra.mxu0 %v62
    %119 = vmatprep.subr.mxu0 0.0
    %120 = vmatpush1.msra.mxu0 %v63
    %121 = vmatprep.subr.mxu0 0.0
    %122 = vmatpush1.msra.mxu0 0.0
    %123 = vmatprep.subr.mxu0 0.0
    %124 = vmatpush1.msra.mxu0 0.0
    %125 = vmatprep.subr.mxu0 0.0
    %126 = vmatpush1.msra.mxu0 0.0
    %127 = vmatprep.subr.mxu0 0.0
    %128 = vmatpush1.msra.mxu0 0.0
    %129 = vmatprep.subr.mxu0 0.0
    %130 = vmatpush1.msra.mxu0 0.0
    %131 = vmatprep.subr.mxu0 0.0
    %132 = vmatpush1.msra.mxu0 0.0
    %133 = vmatprep.subr.mxu0 0.0
    %134 = vmatpush1.msra.mxu0 0.0
    %135 = vmatprep.subr.mxu0 0.0
    %136 = vmatpush1.msra.mxu0 0.0
    %137 = vmatprep.subr.mxu0 0.0
    %138 = vmatpush1.msra.mxu0 0.0
    %139 = vmatprep.subr.mxu0 0.0
    %140 = vmatpush1.msra.mxu0 0.0
    %141 = vmatprep.subr.mxu0 0.0
    %142 = vmatpush1.msra.mxu0 0.0
    %143 = vmatprep.subr.mxu0 0.0
    %144 = vmatpush1.msra.mxu0 0.0
    %145 = vmatprep.subr.mxu0 0.0
    %146 = vmatpush1.msra.mxu0 0.0
    %147 = vmatprep.subr.mxu0 0.0
    %148 = vmatpush1.msra.mxu0 0.0
    %149 = vmatprep.subr.mxu0 0.0
    %150 = vmatpush1.msra.mxu0 0.0
    %151 = vmatprep.subr.mxu0 0.0
    %152 = vmatpush1.msra.mxu0 0.0
    %153 = vmatprep.subr.mxu0 0.0
    %154 = vmatpush1.msra.mxu0 0.0
    %155 = vmatprep.subr.mxu0 0.0
    %156 = vmatpush1.msra.mxu0 0.0
    %157 = vmatprep.subr.mxu0 0.0
    %158 = vmatpush1.msra.mxu0 0.0
    %159 = vmatprep.subr.mxu0 0.0
    %160 = vmatpush1.msra.mxu0 0.0
    %161 = vmatprep.subr.mxu0 0.0
    %162 = vmatpush1.msra.mxu0 0.0
    %163 = vmatprep.subr.mxu0 0.0
    %164 = vmatpush1.msra.mxu0 0.0
    %165 = vmatprep.subr.mxu0 0.0
    %166 = vmatpush1.msra.mxu0 0.0
    %167 = vmatprep.subr.mxu0 0.0
    %168 = vmatpush1.msra.mxu0 0.0
    %169 = vmatprep.mubr.f32.mxu0 0.0
    %170 = vmatmul.mubr.f32.gmra.mrb[0].mxu0 %v103
    %v171 = vpop.f32.mrb[0].mxu0
    %v172 = vadd.f32 0.0, %v171
    %v173 = vpop.f32.mrb[0].mxu0
    %174 = vdwg.mxu0
    %v175 = vlaneseq
    %v176 = vshrl.u32 %v175, 7
    %v177 = vsub.s32 1, %v176
    %v178 = vrot.slane %v41, %v177
    %v179 = vmul.f32 %v172, %v178
    %v181 = vsel %vm101, %v95, 0
    %183 = vmatprep.subr.mxu0 0.0
    %184 = vmatpush1.msra.mxu0 %v48
    %185 = vmatprep.subr.mxu0 0.0
    %186 = vmatpush1.msra.mxu0 %v49
    %187 = vmatprep.subr.mxu0 0.0
    %188 = vmatpush1.msra.mxu0 %v50
    %189 = vmatprep.subr.mxu0 0.0
    %190 = vmatpush1.msra.mxu0 %v51
    %191 = vmatprep.subr.mxu0 0.0
    %192 = vmatpush1.msra.mxu0 %v52
    %193 = vmatprep.subr.mxu0 0.0
    %194 = vmatpush1.msra.mxu0 %v53
    %195 = vmatprep.subr.mxu0 0.0
    %196 = vmatpush1.msra.mxu0 %v54
    %197 = vmatprep.subr.mxu0 0.0
    %198 = vmatpush1.msra.mxu0 %v55
    %199 = vmatprep.subr.mxu0 0.0
    %200 = vmatpush1.msra.mxu0 0.0
    %201 = vmatprep.subr.mxu0 0.0
    %202 = vmatpush1.msra.mxu0 0.0
    %203 = vmatprep.subr.mxu0 0.0
    %204 = vmatpush1.msra.mxu0 0.0
    %205 = vmatprep.subr.mxu0 0.0
    %206 = vmatpush1.msra.mxu0 0.0
    %207 = vmatprep.subr.mxu0 0.0
    %208 = vmatpush1.msra.mxu0 0.0
    %209 = vmatprep.subr.mxu0 0.0
    %210 = vmatpush1.msra.mxu0 0.0
    %211 = vmatprep.subr.mxu0 0.0
    %212 = vmatpush1.msra.mxu0 0.0
    %213 = vmatprep.subr.mxu0 0.0
    %214 = vmatpush1.msra.mxu0 0.0
    %215 = vmatprep.subr.mxu0 0.0
    %216 = vmatpush1.msra.mxu0 0.0
    %217 = vmatprep.subr.mxu0 0.0
    %218 = vmatpush1.msra.mxu0 0.0
    %219 = vmatprep.subr.mxu0 0.0
    %220 = vmatpush1.msra.mxu0 0.0
    %221 = vmatprep.subr.mxu0 0.0
    %222 = vmatpush1.msra.mxu0 0.0
    %223 = vmatprep.subr.mxu0 0.0
    %224 = vmatpush1.msra.mxu0 0.0
    %225 = vmatprep.subr.mxu0 0.0
    %226 = vmatpush1.msra.mxu0 0.0
    %227 = vmatprep.subr.mxu0 0.0
    %228 = vmatpush1.msra.mxu0 0.0
    %229 = vmatprep.subr.mxu0 0.0
    %230 = vmatpush1.msra.mxu0 0.0
    %231 = vmatprep.subr.mxu0 0.0
    %232 = vmatpush1.msra.mxu0 0.0
    %233 = vmatprep.subr.mxu0 0.0
    %234 = vmatpush1.msra.mxu0 0.0
    %235 = vmatprep.subr.mxu0 0.0
    %236 = vmatpush1.msra.mxu0 0.0
    %237 = vmatprep.subr.mxu0 0.0
    %238 = vmatpush1.msra.mxu0 0.0
    %239 = vmatprep.subr.mxu0 0.0
    %240 = vmatpush1.msra.mxu0 0.0
    %241 = vmatprep.subr.mxu0 0.0
    %242 = vmatpush1.msra.mxu0 0.0
    %243 = vmatprep.subr.mxu0 0.0
    %244 = vmatpush1.msra.mxu0 0.0
    %245 = vmatprep.subr.mxu0 0.0
    %246 = vmatpush1.msra.mxu0 0.0
    %247 = vmatprep.mubr.f32.mxu0 0.0
    %248 = vmatmul.mubr.f32.gmra.mrb[0].mxu0 %v181
    %v249 = vpop.f32.mrb[0].mxu0
    %v250 = vadd.f32 %v179, %v249
    %v251 = vpop.f32.mrb[0].mxu0
    %252 = vdwg.mxu0
    %v253 = vlaneseq
    %v254 = vshrl.u32 %v253, 7
    %v255 = vsub.s32 0, %v254
    %v256 = vrot.slane %v44, %v255
    %v257 = vadd.f32 %v250, %v256
    %v259 = vrot.slane %v41, 1
    %v261 = vmul.f32 %v45, %v259
    %v262 = vlaneseq
    %v263 = vshrl.u32 %v262, 7
    %v264 = vsub.s32 0, %v263
    %v265 = vrot.slane %v261, %v264
    %v266 = vadd.f32 %v257, %v265
    %v267 = vmax.f32 %v266, 0.0
    %v268 = vlaneseq
    %v269 = vshrl.u32 %v268, 7
    %v270 = vsub.s32 2, %v269
    %v271 = vrot.slane %v41, %v270
    %v272 = vmul.f32 %v267, %v271
    %v274 = vsel %vm101, %v272, 0
    %276 = vmatprep.subr.mxu0 0.0
    %277 = vmatpush1.msra.mxu0 %v72
    %278 = vmatprep.subr.mxu0 0.0
    %279 = vmatpush1.msra.mxu0 %v73
    %280 = vmatprep.subr.mxu0 0.0
    %281 = vmatpush1.msra.mxu0 %v74
    %282 = vmatprep.subr.mxu0 0.0
    %283 = vmatpush1.msra.mxu0 %v75
    %284 = vmatprep.subr.mxu0 0.0
    %285 = vmatpush1.msra.mxu0 %v76
    %286 = vmatprep.subr.mxu0 0.0
    %287 = vmatpush1.msra.mxu0 %v77
    %288 = vmatprep.subr.mxu0 0.0
    %289 = vmatpush1.msra.mxu0 %v78
    %290 = vmatprep.subr.mxu0 0.0
    %291 = vmatpush1.msra.mxu0 %v79
    %292 = vmatprep.subr.mxu0 0.0
    %293 = vmatpush1.msra.mxu0 0.0
    %294 = vmatprep.subr.mxu0 0.0
    %295 = vmatpush1.msra.mxu0 0.0
    %296 = vmatprep.subr.mxu0 0.0
    %297 = vmatpush1.msra.mxu0 0.0
    %298 = vmatprep.subr.mxu0 0.0
    %299 = vmatpush1.msra.mxu0 0.0
    %300 = vmatprep.subr.mxu0 0.0
    %301 = vmatpush1.msra.mxu0 0.0
    %302 = vmatprep.subr.mxu0 0.0
    %303 = vmatpush1.msra.mxu0 0.0
    %304 = vmatprep.subr.mxu0 0.0
    %305 = vmatpush1.msra.mxu0 0.0
    %306 = vmatprep.subr.mxu0 0.0
    %307 = vmatpush1.msra.mxu0 0.0
    %308 = vmatprep.subr.mxu0 0.0
    %309 = vmatpush1.msra.mxu0 0.0
    %310 = vmatprep.subr.mxu0 0.0
    %311 = vmatpush1.msra.mxu0 0.0
    %312 = vmatprep.subr.mxu0 0.0
    %313 = vmatpush1.msra.mxu0 0.0
    %314 = vmatprep.subr.mxu0 0.0
    %315 = vmatpush1.msra.mxu0 0.0
    %316 = vmatprep.subr.mxu0 0.0
    %317 = vmatpush1.msra.mxu0 0.0
    %318 = vmatprep.subr.mxu0 0.0
    %319 = vmatpush1.msra.mxu0 0.0
    %320 = vmatprep.subr.mxu0 0.0
    %321 = vmatpush1.msra.mxu0 0.0
    %322 = vmatprep.subr.mxu0 0.0
    %323 = vmatpush1.msra.mxu0 0.0
    %324 = vmatprep.subr.mxu0 0.0
    %325 = vmatpush1.msra.mxu0 0.0
    %326 = vmatprep.subr.mxu0 0.0
    %327 = vmatpush1.msra.mxu0 0.0
    %328 = vmatprep.subr.mxu0 0.0
    %329 = vmatpush1.msra.mxu0 0.0
    %330 = vmatprep.subr.mxu0 0.0
    %331 = vmatpush1.msra.mxu0 0.0
    %332 = vmatprep.subr.mxu0 0.0
    %333 = vmatpush1.msra.mxu0 0.0
    %334 = vmatprep.subr.mxu0 0.0
    %335 = vmatpush1.msra.mxu0 0.0
    %336 = vmatprep.subr.mxu0 0.0
    %337 = vmatpush1.msra.mxu0 0.0
    %338 = vmatprep.subr.mxu0 0.0
    %339 = vmatpush1.msra.mxu0 0.0
    %340 = vmatprep.mubr.f32.mxu0 0.0
    %341 = vmatmul.mubr.f32.gmra.mrb[0].mxu0 %v274
    %v342 = vpop.f32.mrb[0].mxu0
    %v343 = vadd.f32 0.0, %v342
    %v344 = vpop.f32.mrb[0].mxu0
    %345 = vdwg.mxu0
    %v346 = vlaneseq
    %v347 = vshrl.u32 %v346, 7
    %v348 = vsub.s32 3, %v347
    %v349 = vrot.slane %v41, %v348
    %v350 = vmul.f32 %v343, %v349
    %v352 = vsel %vm101, %v267, 0
    %354 = vmatprep.subr.mxu0 0.0
    %355 = vmatpush1.msra.mxu0 %v64
    %356 = vmatprep.subr.mxu0 0.0
    %357 = vmatpush1.msra.mxu0 %v65
    %358 = vmatprep.subr.mxu0 0.0
    %359 = vmatpush1.msra.mxu0 %v66
    %360 = vmatprep.subr.mxu0 0.0
    %361 = vmatpush1.msra.mxu0 %v67
    %362 = vmatprep.subr.mxu0 0.0
    %363 = vmatpush1.msra.mxu0 %v68
    %364 = vmatprep.subr.mxu0 0.0
    %365 = vmatpush1.msra.mxu0 %v69
    %366 = vmatprep.subr.mxu0 0.0
    %367 = vmatpush1.msra.mxu0 %v70
    %368 = vmatprep.subr.mxu0 0.0
    %369 = vmatpush1.msra.mxu0 %v71
    %370 = vmatprep.subr.mxu0 0.0
    %371 = vmatpush1.msra.mxu0 0.0
    %372 = vmatprep.subr.mxu0 0.0
    %373 = vmatpush1.msra.mxu0 0.0
    %374 = vmatprep.subr.mxu0 0.0
    %375 = vmatpush1.msra.mxu0 0.0
    %376 = vmatprep.subr.mxu0 0.0
    %377 = vmatpush1.msra.mxu0 0.0
    %378 = vmatprep.subr.mxu0 0.0
    %379 = vmatpush1.msra.mxu0 0.0
    %380 = vmatprep.subr.mxu0 0.0
    %381 = vmatpush1.msra.mxu0 0.0
    %382 = vmatprep.subr.mxu0 0.0
    %383 = vmatpush1.msra.mxu0 0.0
    %384 = vmatprep.subr.mxu0 0.0
    %385 = vmatpush1.msra.mxu0 0.0
    %386 = vmatprep.subr.mxu0 0.0
    %387 = vmatpush1.msra.mxu0 0.0
    %388 = vmatprep.subr.mxu0 0.0
    %389 = vmatpush1.msra.mxu0 0.0
    %390 = vmatprep.subr.mxu0 0.0
    %391 = vmatpush1.msra.mxu0 0.0
    %392 = vmatprep.subr.mxu0 0.0
    %393 = vmatpush1.msra.mxu0 0.0
    %394 = vmatprep.subr.mxu0 0.0
    %395 = vmatpush1.msra.mxu0 0.0
    %396 = vmatprep.subr.mxu0 0.0
    %397 = vmatpush1.msra.mxu0 0.0
    %398 = vmatprep.subr.mxu0 0.0
    %399 = vmatpush1.msra.mxu0 0.0
    %400 = vmatprep.subr.mxu0 0.0
    %401 = vmatpush1.msra.mxu0 0.0
    %402 = vmatprep.subr.mxu0 0.0
    %403 = vmatpush1.msra.mxu0 0.0
    %404 = vmatprep.subr.mxu0 0.0
    %405 = vmatpush1.msra.mxu0 0.0
    %406 = vmatprep.subr.mxu0 0.0
    %407 = vmatpush1.msra.mxu0 0.0
    %408 = vmatprep.subr.mxu0 0.0
    %409 = vmatpush1.msra.mxu0 0.0
    %410 = vmatprep.subr.mxu0 0.0
    %411 = vmatpush1.msra.mxu0 0.0
    %412 = vmatprep.subr.mxu0 0.0
    %413 = vmatpush1.msra.mxu0 0.0
    %414 = vmatprep.subr.mxu0 0.0
    %415 = vmatpush1.msra.mxu0 0.0
    %416 = vmatprep.subr.mxu0 0.0
    %417 = vmatpush1.msra.mxu0 0.0
    %418 = vmatprep.mubr.f32.mxu0 0.0
    %419 = vmatmul.mubr.f32.gmra.mrb[0].mxu0 %v352
    %v420 = vpop.f32.mrb[0].mxu0
    %v421 = vadd.f32 %v350, %v420
    %v422 = vpop.f32.mrb[0].mxu0
    %423 = vdwg.mxu0
    %v424 = vlaneseq
    %v425 = vshrl.u32 %v424, 7
    %v426 = vsub.s32 0, %v425
    %v427 = vrot.slane %v46, %v426
    %v428 = vadd.f32 %v421, %v427
    %v429 = vrot.slane %v41, 3
    %v431 = vmul.f32 %v47, %v429
    %v432 = vlaneseq
    %v433 = vshrl.u32 %v432, 7
    %v434 = vsub.s32 0, %v433
    %v435 = vrot.slane %v431, %v434
    %v436 = vadd.f32 %v428, %v435
    %437 = vadd.xlane.f32.xlu0 %v436
    %v438 = vpop.xlane.xlu0 %437
    %v439 = vrot.slane %v438, 4
    %v440 = vadd.f32 %v438, %v439
    %v441 = vrot.slane %v440, 2
    %v442 = vadd.f32 %v440, %v441
    %v443 = vrot.slane %v442, 1
    %v444 = vadd.f32 %v442, %v443
    %s445 = vtos %v444
    %447 = vrot.lane.b32.xlu0 %v436, 120
    %v448 = vpop.permute.xlu0 %447
    %vm450 = vcmask 7168
    %v451 = vsel %vm450, %v448, 0.0
    %452 = vadd.xlane.f32.xlu0 %v451
    %v453 = vpop.xlane.xlu0 %452
    %v454 = vrot.slane %v453, 4
    %v455 = vadd.f32 %v453, %v454
    %v456 = vrot.slane %v455, 2
    %v457 = vadd.f32 %v455, %v456
    %v458 = vrot.slane %v457, 1
    %v459 = vadd.f32 %v457, %v458
    %s460 = vtos %v459
    %s461 = ssub.f32 %s445, %s460
    %s462 = smul.f32 %s461, 0.015625
    %v463 = vstv %s462
    %v464 = vsub.f32 %v436, %v463
    %466 = vset.pattern.permute.xlu0 8
    %467 = vperm.xlu0 %466, %v464
    %v468 = vpop.permute.xlu0 %467
    %v470 = vadd.f32 %v436, %v468
    %471 = vst [vmem:[#allocation5] sm:$0xff] %v470
    // Predicated region
    $region18: #{noisy_dueling_forward.1} parent=1 // pred_check
      _
    $region19: #{noisy_dueling_forward.1} parent=1 // pred_check_branch
      %473 = sbr.rel (0) target = $region21
    $region20: #{noisy_dueling_forward.1} parent=1 // pred_region
      %s475 = ssub.s32 128, 128
      %476 = vsyncadd [#allocation4], %s475
      %s478 = sshll.u32 [#allocation5], 4
      %s479 = int_to_ptr.vmem [resolvable:$true] %s478
      %481 = dma.vmem_to_hbm [thread:$0]  %s479, 128, %s3, [#allocation4]
    $region21: #{noisy_dueling_forward.1} parent=1 // pred_fallthru
      _
    // Predicated region
    $region22: #{noisy_dueling_forward.1} parent=1 // pred_check
      _
    $region23: #{noisy_dueling_forward.1} parent=1 // pred_check_branch
      %483 = sbr.rel (0) target = $region25
    $region24: #{noisy_dueling_forward.1} parent=1 // pred_region
      %484 = dma.done [#allocation4], 128
    $region25: #{noisy_dueling_forward.1} parent=1 // pred_fallthru
      _
    %485 = vsyncpa [#allocation3], 1
    %486 = vsyncpa [#allocation4], 1

</llo_original>
